<compile_context>
chip_gen: v5e
topology: v5e:2x2
jax: 0.10.0
libtpu: 0.0.40
codegen_flags: <defaults>
</compile_context>

<pallas_src>
import functools

import jax
import jax.numpy as jnp
from jax import lax
from jax.experimental import pallas as pl
from jax.experimental.pallas import tpu as pltpu

_EPS = 2.3e-08  # matches the module's eps placement: (sum((t-mu)^2) + eps) / HW


def _adain_kernel(x_ref, y_ref, o_ref, *, hw):
    # x_ref / y_ref / o_ref: (c_block, HW_pad) or (c_block, S, 128) VMEM blocks.
    x = x_ref[...]
    y = y_ref[...]

    def _sums(t):
        # Single traversal: sum(t) and sum(t*t), both accumulated in f32.
        # Reduce the sublane-major axis first so almost all reduction work is
        # VPU cross-vreg adds; only the final (c, 1, 128) residue hits the XLU
        # (2 XLUs vs 4 VALUs on v6e/v7x).
        sq = t * t
        if t.ndim == 3:
            s = jnp.sum(t, axis=-2, keepdims=True, dtype=jnp.float32)
            s2 = jnp.sum(sq, axis=-2, keepdims=True, dtype=jnp.float32)
            s = jnp.sum(s, axis=-1, keepdims=True)
            s2 = jnp.sum(s2, axis=-1, keepdims=True)
        else:
            s = jnp.sum(t, axis=-1, keepdims=True, dtype=jnp.float32)
            s2 = jnp.sum(sq, axis=-1, keepdims=True, dtype=jnp.float32)
        return s, s2

    sx, sx2 = _sums(x)
    sy, sy2 = _sums(y)

    # Per-channel means (eq. 5). `hw` is the true (unpadded) element count.
    mu_x = sx / hw
    mu_y = sy / hw

    # One-pass variance: sum((t-mu)^2) == sum(t^2) - hw*mu^2. Clamp the f32
    # cancellation at 0, then keep the module's eps placement (eq. 6).
    ssd_x = jnp.maximum(sx2 - hw * mu_x * mu_x, 0.0)
    ssd_y = jnp.maximum(sy2 - hw * mu_y * mu_y, 0.0)
    var_x = (ssd_x + _EPS) / hw
    var_y = (ssd_y + _EPS) / hw

    # rsqrt/sqrt go to the EUP slot; per-channel only, essentially free.
    scale = jnp.sqrt(var_y) * lax.rsqrt(var_x)
    shift = mu_y - mu_x * scale

    # Final pass: single FMA in the input's native dtype (bf16 stays bf16 on
    # v6e/v7x instead of materializing full-block f32 copies).
    scale_c = scale.astype(x.dtype)
    shift_c = shift.astype(x.dtype)
    o_ref[...] = (x * scale_c + shift_c).astype(o_ref.dtype)


def _vmem_capacity_bytes():
    try:
        info = pltpu.get_tpu_info()
        cap = getattr(info, "vmem_capacity_bytes", None)
        if cap:
            return int(cap)
    except Exception:
        pass
    return 64 * 1024 * 1024  # conservative (v7x per-TC VMEM)


def _pick_c_block(N, C, elems_per_chan, itemsize, budget):
    """Largest channel block whose double-buffered (x, y, out) pipeline stays
    inside `budget`, subject to the (8, 128) sublane rule (bc % 8 == 0 or
    bc == C), then shrunk (if possible) so the grid has >= 4 steps for the
    two v7x TensorCores."""
    bytes_per_chan = 3 * 2 * elems_per_chan * itemsize
    max_c = max(1, budget // bytes_per_chan)

    divisors = [d for d in range(1, C + 1)
                if C % d == 0 and (d % 8 == 0 or d == C)]
    fits = [d for d in divisors if d <= max_c]
    if not fits:
        # TODO(synk): tile the spatial axis with cross-step accumulation for
        # channels whose single-channel block exceeds the VMEM budget.
        return min(divisors)

    bc = max(fits)
    # Keep both v7x TensorCores busy when C allows, but never drop the block
    # below ~512 KiB (DMA efficiency floor).
    min_block_bytes = 512 * 1024
    while N * (C // bc) < 4:
        smaller = [d for d in fits
                   if d < bc and d * elems_per_chan * itemsize >= min_block_bytes]
        if not smaller:
            break
        bc = max(smaller)
    return bc


def adain(x, y, *, c_block=None):
    """x, y: (N, C, H, W) arrays. Returns (N, C, H, W)."""
    assert x.shape == y.shape and x.ndim == 4
    N, C, H, W = x.shape
    HW = H * W
    itemsize = jnp.dtype(x.dtype).itemsize

    # Lane-dense spatial layout.
    if HW % (8 * 128) == 0:
        hw_pad = HW
        spatial_shape = (HW // 128, 128)          # sublane-packed
    else:
        hw_pad = ((HW + 127) // 128) * 128
        spatial_shape = (hw_pad,)                 # flat, zero-padded to 128*k

    # Per-generation VMEM budgets (v5e/v6e: 128 MiB physical; v7x: 64 MiB/TC).
    vmem_cap = _vmem_capacity_bytes()
    if vmem_cap >= 100 * 1024 * 1024:
        budget, vmem_limit = 12 * 1024 * 1024, 64 * 1024 * 1024
    else:
        budget, vmem_limit = 8 * 1024 * 1024, 40 * 1024 * 1024

    if c_block is not None:
        bc = min(c_block, C)
        assert C % bc == 0, "channel block must divide C"
        assert bc == C or bc % 8 == 0, "channel block must be C or a multiple of 8"
    else:
        bc = _pick_c_block(N, C, hw_pad, itemsize, budget)

    # Reshape (and zero-pad the spatial axis if needed).
    xf = x.reshape(N, C, HW)
    yf = y.reshape(N, C, HW)
    if hw_pad != HW:
        pad = ((0, 0), (0, 0), (0, hw_pad - HW))
        xf = jnp.pad(xf, pad)
        yf = jnp.pad(yf, pad)
    arr_shape = (N, C) + spatial_shape
    xf = xf.reshape(arr_shape)
    yf = yf.reshape(arr_shape)

    zeros = (0,) * len(spatial_shape)
    spec = pl.BlockSpec(
        (pl.Squeezed(), bc) + spatial_shape,
        lambda n, c: (n, c) + zeros,
    )

    cost = pl.CostEstimate(
        flops=10 * N * C * HW,
        transcendentals=2 * N * C,
        bytes_accessed=3 * N * C * hw_pad * itemsize,
    )

    out = pl.pallas_call(
        functools.partial(_adain_kernel, hw=float(HW)),
        out_shape=jax.ShapeDtypeStruct(arr_shape, x.dtype),
        grid_spec=pltpu.PrefetchScalarGridSpec(
            num_scalar_prefetch=0,
            grid=(N, C // bc),
            in_specs=[spec, spec],
            out_specs=spec,
        ),
        compiler_params=pltpu.CompilerParams(
            dimension_semantics=("parallel", "parallel"),
            vmem_limit_bytes=vmem_limit,
        ),
        cost_estimate=cost,
    )(xf, yf)

    out = out.reshape(N, C, hw_pad)
    if hw_pad != HW:
        out = out[:, :, :HW]
    return out.reshape(N, C, H, W)


def _adain_ref(x, y):
    """Pure-JAX reference matching the PyTorch module exactly (two-pass)."""
    hw = x.shape[2] * x.shape[3]
    mu = lambda t: jnp.sum(t, axis=(2, 3)) / hw                        # (N, C)
    sig = lambda t: jnp.sqrt(
        (jnp.sum((t - mu(t)[:, :, None, None]) ** 2, axis=(2, 3)) + _EPS) / hw
    )                                                                   # (N, C)
    return (
        sig(y)[:, :, None, None]
        * ((x - mu(x)[:, :, None, None]) / sig(x)[:, :, None, None])
        + mu(y)[:, :, None, None]
    )


if __name__ == "__main__":
    key = jax.random.PRNGKey(0)

    def _run_case(shape, c_block=None, dtype=jnp.float32, atol=1e-4, rtol=1e-4):
        k = jax.random.fold_in(key, shape[1] * 100000 + shape[2])
        kx, ky = jax.random.split(k)
        x = jax.random.normal(kx, shape, dtype=jnp.float32)
        y = jax.random.normal(ky, shape, dtype=jnp.float32) * 2.0 + 0.5
        ref = _adain_ref(x, y)
        x = x.astype(dtype)
        y = y.astype(dtype)
        out = adain(x, y, c_block=c_block)
        jax.block_until_ready(out)
        assert out.shape == shape
        assert jnp.allclose(out.astype(jnp.float32), ref, atol=atol, rtol=rtol), \
            f"mismatch at {shape} dtype={dtype}"
        return out

    _run_case((2, 4, 16, 16))               # flat (C, HW) layout, full-C block
    _run_case((2, 4, 32, 32))               # sublane-packed (S, 128) layout
    _run_case((2, 16, 16, 16), c_block=8)   # channel-tiled, flat layout
    _run_case((2, 8, 7, 7))                 # odd HW -> zero-padded lane-dense path
    _run_case((2, 4, 32, 32), dtype=jnp.bfloat16, atol=5e-2, rtol=5e-2)  # bf16 native FMA
    print("KERNEL_OK")
</pallas_src>

<mosaic_0001>
module attributes {stable_mosaic.version = 11 : i64} {
  func.func @_adain_kernel(%arg0: i32, %arg1: i32, %arg2: memref<1x4x256xf32, #tpu.memory_space<vmem>>, %arg3: memref<1x4x256xf32, #tpu.memory_space<vmem>>, %arg4: memref<1x4x256xf32, #tpu.memory_space<vmem>>) attributes {dimension_semantics = [#tpu.dimension_semantics<parallel>, #tpu.dimension_semantics<parallel>], iteration_bounds = array<i64: 2, 1>, scalar_prefetch = 0 : i64, scratch_operands = 0 : i64, tpu.core_type = #tpu.core_type<tc>, window_params = [{transform_indices = @transform_0, window_bounds = array<i64: 1, 4, 256>}, {transform_indices = @transform_1, window_bounds = array<i64: 1, 4, 256>}, {transform_indices = @transform_2, window_bounds = array<i64: 1, 4, 256>}]} {
    %c0 = arith.constant 0 : index
    %c0_0 = arith.constant 0 : index
    %c0_1 = arith.constant 0 : index
    %0 = vector.load %arg2[%c0, %c0_0, %c0_1] : memref<1x4x256xf32, #tpu.memory_space<vmem>>, vector<1x4x256xf32>
    %1 = vector.shape_cast %0 : vector<1x4x256xf32> to vector<4x256xf32>
    %c0_2 = arith.constant 0 : index
    %c0_3 = arith.constant 0 : index
    %c0_4 = arith.constant 0 : index
    %2 = vector.load %arg3[%c0_2, %c0_3, %c0_4] : memref<1x4x256xf32, #tpu.memory_space<vmem>>, vector<1x4x256xf32>
    %3 = vector.shape_cast %2 : vector<1x4x256xf32> to vector<4x256xf32>
    %4 = arith.mulf %1, %1 : vector<4x256xf32>
    %cst = arith.constant dense<0.000000e+00> : vector<4xf32>
    %5 = vector.multi_reduction <add>, %1, %cst [1] : vector<4x256xf32> to vector<4xf32>
    %6 = vector.shape_cast %5 : vector<4xf32> to vector<4x1xf32>
    %cst_5 = arith.constant dense<0.000000e+00> : vector<4xf32>
    %7 = vector.multi_reduction <add>, %4, %cst_5 [1] : vector<4x256xf32> to vector<4xf32>
    %8 = vector.shape_cast %7 : vector<4xf32> to vector<4x1xf32>
    %9 = arith.mulf %3, %3 : vector<4x256xf32>
    %cst_6 = arith.constant dense<0.000000e+00> : vector<4xf32>
    %10 = vector.multi_reduction <add>, %3, %cst_6 [1] : vector<4x256xf32> to vector<4xf32>
    %11 = vector.shape_cast %10 : vector<4xf32> to vector<4x1xf32>
    %cst_7 = arith.constant dense<0.000000e+00> : vector<4xf32>
    %12 = vector.multi_reduction <add>, %9, %cst_7 [1] : vector<4x256xf32> to vector<4xf32>
    %13 = vector.shape_cast %12 : vector<4xf32> to vector<4x1xf32>
    %cst_8 = arith.constant 2.560000e+02 : f32
    %14 = vector.broadcast %cst_8 : f32 to vector<4x1xf32>
    %15 = arith.divf %6, %14 : vector<4x1xf32>
    %cst_9 = arith.constant 2.560000e+02 : f32
    %16 = vector.broadcast %cst_9 : f32 to vector<4x1xf32>
    %17 = arith.divf %11, %16 : vector<4x1xf32>
    %cst_10 = arith.constant 2.560000e+02 : f32
    %18 = vector.broadcast %cst_10 : f32 to vector<4x1xf32>
    %19 = arith.mulf %18, %15 : vector<4x1xf32>
    %20 = arith.mulf %19, %15 : vector<4x1xf32>
    %21 = arith.subf %8, %20 : vector<4x1xf32>
    %cst_11 = arith.constant 0.000000e+00 : f32
    %22 = vector.broadcast %cst_11 : f32 to vector<4x1xf32>
    %23 = arith.maximumf %21, %22 : vector<4x1xf32>
    %cst_12 = arith.constant 2.560000e+02 : f32
    %24 = vector.broadcast %cst_12 : f32 to vector<4x1xf32>
    %25 = arith.mulf %24, %17 : vector<4x1xf32>
    %26 = arith.mulf %25, %17 : vector<4x1xf32>
    %27 = arith.subf %13, %26 : vector<4x1xf32>
    %cst_13 = arith.constant 0.000000e+00 : f32
    %28 = vector.broadcast %cst_13 : f32 to vector<4x1xf32>
    %29 = arith.maximumf %27, %28 : vector<4x1xf32>
    %cst_14 = arith.constant 2.300000e-08 : f32
    %30 = vector.broadcast %cst_14 : f32 to vector<4x1xf32>
    %31 = arith.addf %23, %30 : vector<4x1xf32>
    %cst_15 = arith.constant 2.560000e+02 : f32
    %32 = vector.broadcast %cst_15 : f32 to vector<4x1xf32>
    %33 = arith.divf %31, %32 : vector<4x1xf32>
    %cst_16 = arith.constant 2.300000e-08 : f32
    %34 = vector.broadcast %cst_16 : f32 to vector<4x1xf32>
    %35 = arith.addf %29, %34 : vector<4x1xf32>
    %cst_17 = arith.constant 2.560000e+02 : f32
    %36 = vector.broadcast %cst_17 : f32 to vector<4x1xf32>
    %37 = arith.divf %35, %36 : vector<4x1xf32>
    %38 = math.sqrt %37 : vector<4x1xf32>
    %39 = math.rsqrt %33 : vector<4x1xf32>
    %40 = arith.mulf %38, %39 : vector<4x1xf32>
    %41 = arith.mulf %15, %40 : vector<4x1xf32>
    %42 = arith.subf %17, %41 : vector<4x1xf32>
    %43 = vector.broadcast %40 : vector<4x1xf32> to vector<4x256xf32>
    %44 = arith.mulf %1, %43 : vector<4x256xf32>
    %45 = vector.broadcast %42 : vector<4x1xf32> to vector<4x256xf32>
    %46 = arith.addf %44, %45 : vector<4x256xf32>
    %c0_18 = arith.constant 0 : index
    %c0_19 = arith.constant 0 : index
    %c0_20 = arith.constant 0 : index
    %47 = vector.load %arg4[%c0_18, %c0_19, %c0_20] : memref<1x4x256xf32, #tpu.memory_space<vmem>>, vector<1x4x256xf32>
    %48 = vector.shape_cast %47 : vector<1x4x256xf32> to vector<4x256xf32>
    %49 = vector.shape_cast %46 : vector<4x256xf32> to vector<1x4x256xf32>
    tpu.vector_store %arg4[%c0_18, %c0_19, %c0_20], %49 {strides = array<i32>} : memref<1x4x256xf32, #tpu.memory_space<vmem>>, vector<1x4x256xf32>,
    return
  }
  func.func @transform_0(%arg0: i32, %arg1: i32) -> (i32, i32, i32) {
    %c0_i32 = arith.constant 0 : i32
    %c0_i32_0 = arith.constant 0 : i32
    return %arg0, %arg1, %c0_i32 : i32, i32, i32
  }
  func.func @transform_1(%arg0: i32, %arg1: i32) -> (i32, i32, i32) {
    %c0_i32 = arith.constant 0 : i32
    %c0_i32_0 = arith.constant 0 : i32
    return %arg0, %arg1, %c0_i32 : i32, i32, i32
  }
  func.func @transform_2(%arg0: i32, %arg1: i32) -> (i32, i32, i32) {
    %c0_i32 = arith.constant 0 : i32
    %c0_i32_0 = arith.constant 0 : i32
    return %arg0, %arg1, %c0_i32 : i32, i32, i32
  }
}

</mosaic_0001>

<llo_original>
// kernel: tpu_custom_call.1
$region0: #{tpu_custom_call.1}
  #allocation0 [shape = 'u32[]', space=smem, size = 0x4, offset = 0x4, fixed_abs, tag = 'smem constant byte address 0x4 - core index']
  #allocation1 [shape = 'u32[72,128]{1,0:T(1,128)}', space=vmem, size = 0x9000, scoped, tag = 'internal scratch']
  %s0 = inlined_call_operand.hbm [shape: f32[2,4,256], index: 0, kind: input, shape index: {}]
  %s1 = inlined_call_operand.hbm [shape: f32[2,4,256], index: 1, kind: input, shape index: {}]
  %s2 = inlined_call_operand.hbm [shape: f32[2,4,256], index: 2, kind: output, shape index: {}]
  %s3 = sld [smem:[#allocation0]]
  $region49: #{tpu_custom_call.1} parent=0
    _
  %s5 = ssub.s32 1, %s3
  %s6 = scalar_select 0, %s5, %s3
  $region1: #{tpu_custom_call.1} parent=0
    #allocation2 [shape = 'u8[8192]{0}', space=vmem, size = 0x2000, scoped, tag = 'input window, operand 0']
    #allocation3 [shape = 's32[2]{0}', space=sflag, size = 0x8, scoped, tag = 'scoped memory for tpu_custom_call.1']
    #allocation4 [shape = 's32[2]{0}', space=sflag, size = 0x8, scoped, tag = 'scoped memory for tpu_custom_call.1']
    #allocation5 [shape = 'u8[8192]{0}', space=vmem, size = 0x2000, scoped, tag = 'input window, operand 1']
    #allocation6 [shape = 's32[2]{0}', space=sflag, size = 0x8, scoped, tag = 'scoped memory for tpu_custom_call.1']
    #allocation7 [shape = 'u8[8192]{0}', space=vmem, size = 0x2000, scoped, tag = 'output window, operand 0']
    %7 = vsyncpa [#allocation3], 0
    %s8 = scalar_lea.sflag [#allocation3], 1
    %9 = vsyncpa %s8, 0
    %10 = vsyncpa [#allocation6], 0
    %s11 = scalar_lea.sflag [#allocation6], 1
    %12 = vsyncpa %s11, 0
    %13 = vsyncpa [#allocation4], 0
    %s14 = scalar_lea.sflag [#allocation4], 1
    %15 = vsyncpa %s14, 0
    loop: start=0, step=1, limit=4
    $region2: #{tpu_custom_call.1} parent=1 // loop_pre_header
      _
    $region3: #{tpu_custom_call.1} parent=1 // loop_header
      %s17 = sphi 0, %s21
      %p18 = scmp.ge.s32.totalorder %s17, 4
      %s24 = sphi 0, %s36
      %s25 = sphi 0, %s32
      %s26 = sphi 0, %s24
      %s27 = sphi 0, %s25
      %s28 = sphi 0, %s26
      %s29 = sphi 0, %s27
      %s41 = sphi 0, %s43
      %s44 = sphi 0, %s41
      %s45 = sphi 0, %s44
      %s61 = sphi 0, %s45
      %s69 = sphi 0, %s71
      %s72 = sphi 0, %s69
      %s73 = sphi 0, %s72
      %s89 = sphi 0, %s73
      %s97 = sphi 0, %s99
      %s100 = sphi 0, %s97
      %s101 = sphi 0, %s100
      %s117 = sphi 0, %s101
    $region4: #{tpu_custom_call.1} parent=1 // loop_header_branch
      %20 = sbr.rel (%p18) target = $region8
    $region5: #{tpu_custom_call.1} parent=1 // loop_body
      %s22 = ssub.s32 %s17, 1
      %s23 = ssub.s32 %s17, 2
      %s30 = sadd.s32 1, %s25
      %p31 = scmp.ge.s32.totalorder %s30, 1
      %s32 = scalar_select %p31, 0, %s30
      %s33 = sadd.s32 1, %s24
      %s34 = scalar_select %p31, %s33, %s24
      %p35 = scmp.ge.s32.totalorder %s34, 2
      %s36 = scalar_select %p35, 0, %s34
      %s37 = ssub.s32 %s24, %s36
      %s38 = ssub.s32 %s25, %s32
      %s39 = sor.u32 %s37, %s38
      %p40 = scmp.eq.s32.totalorder %s39, 0
      %s42 = sadd.s32 %s41, 1
      %s43 = scalar_select %p40, %s41, %s42
      %p46 = pneg %p40
      %p47 = scmp.eq.s32.totalorder %s17, 1
      %p48 = por %p46, %p47
      %p49 = scmp.ne.s32.totalorder %s41, %s44
      %p50 = scmp.eq.s32.totalorder %s17, 0
      %p51 = por %p49, %p50
      %p52 = scmp.ne.s32.totalorder %s41, %s44
      %p53 = scmp.eq.s32.totalorder %s22, 1
      %p54 = por %p52, %p53
      %p55 = scmp.ne.s32.totalorder %s44, %s45
      %p56 = scmp.eq.s32.totalorder %s22, 0
      %p57 = por %p55, %p56
      %p58 = scmp.ne.s32.totalorder %s44, %s45
      %p59 = scmp.eq.s32.totalorder %s23, 1
      %p60 = por %p58, %p59
      %p62 = scmp.ne.s32.totalorder %s45, %s61
      %p63 = scmp.eq.s32.totalorder %s23, 0
      %p64 = por %p62, %p63
      %s65 = ssub.s32 %s24, %s36
      %s66 = ssub.s32 %s25, %s32
      %s67 = sor.u32 %s65, %s66
      %p68 = scmp.eq.s32.totalorder %s67, 0
      %s70 = sadd.s32 %s69, 1
      %s71 = scalar_select %p68, %s69, %s70
      %p74 = pneg %p68
      %p75 = scmp.eq.s32.totalorder %s17, 1
      %p76 = por %p74, %p75
      %p77 = scmp.ne.s32.totalorder %s69, %s72
      %p78 = scmp.eq.s32.totalorder %s17, 0
      %p79 = por %p77, %p78
      %p80 = scmp.ne.s32.totalorder %s69, %s72
      %p81 = scmp.eq.s32.totalorder %s22, 1
      %p82 = por %p80, %p81
      %p83 = scmp.ne.s32.totalorder %s72, %s73
      %p84 = scmp.eq.s32.totalorder %s22, 0
      %p85 = por %p83, %p84
      %p86 = scmp.ne.s32.totalorder %s72, %s73
      %p87 = scmp.eq.s32.totalorder %s23, 1
      %p88 = por %p86, %p87
      %p90 = scmp.ne.s32.totalorder %s73, %s89
      %p91 = scmp.eq.s32.totalorder %s23, 0
      %p92 = por %p90, %p91
      %s93 = ssub.s32 %s24, %s36
      %s94 = ssub.s32 %s25, %s32
      %s95 = sor.u32 %s93, %s94
      %p96 = scmp.eq.s32.totalorder %s95, 0
      %s98 = sadd.s32 %s97, 1
      %s99 = scalar_select %p96, %s97, %s98
      %p102 = pneg %p96
      %p103 = scmp.eq.s32.totalorder %s17, 1
      %p104 = por %p102, %p103
      %p105 = scmp.ne.s32.totalorder %s97, %s100
      %p106 = scmp.eq.s32.totalorder %s17, 0
      %p107 = por %p105, %p106
      %p108 = scmp.ne.s32.totalorder %s97, %s100
      %p109 = scmp.eq.s32.totalorder %s22, 1
      %p110 = por %p108, %p109
      %p111 = scmp.ne.s32.totalorder %s100, %s101
      %p112 = scmp.eq.s32.totalorder %s22, 0
      %p113 = por %p111, %p112
      %p114 = scmp.ne.s32.totalorder %s100, %s101
      %p115 = scmp.eq.s32.totalorder %s23, 1
      %p116 = por %p114, %p115
      %p118 = scmp.ne.s32.totalorder %s101, %s117
      %p119 = scmp.eq.s32.totalorder %s23, 0
      %p120 = por %p118, %p119
      %p121 = scmp.le.s32.totalorder 1, %s17
      %p122 = scmp.lt.s32.totalorder %s17, 3
      %p123 = pnand %p121, %p122
      %p124 = pneg %p123
      // Predicated region
      $region9: #{tpu_custom_call.1} parent=5 // pred_check
        _
      $region10: #{tpu_custom_call.1} parent=5 // pred_check_branch
        %126 = sbr.rel (%p123) target = $region12
      $region11: #{tpu_custom_call.1} parent=5 // pred_region
        %s127 = ssub.s32 %s17, 1
      $region12: #{tpu_custom_call.1} parent=5 // pred_fallthru
        _
      %p128 = scmp.lt.s32.totalorder %s17, 2
      // Predicated region
      $region13: #{tpu_custom_call.1} parent=5 // pred_check
        %p129 = pneg %p128
      $region14: #{tpu_custom_call.1} parent=5 // pred_check_branch
        %131 = sbr.rel (%p129) target = $region16
      $region15: #{tpu_custom_call.1} parent=5 // pred_region
        // Predicated region
        $region17: #{tpu_custom_call.1} parent=15 // pred_check
          %p132 = pneg %p51
        $region18: #{tpu_custom_call.1} parent=15 // pred_check_branch
          %134 = sbr.rel (%p132) target = $region20
        $region19: #{tpu_custom_call.1} parent=15 // pred_region
          %s135 = sand.u32 %s41, 1
          %s136 = scalar_lea.sflag [#allocation3], %s135
          %s137 = sand.u32 %s41, 1
          %s138 = smul.addr %s137, 8
          %s139 = scalar_lea.vmem [#allocation2], %s138
          %141 = vsyncadd %s136, 0
          %s142 = smul.addr %s25, 2
          %s143 = smul.addr %s24, 2
          %s144 = sadd.s32 %s142, %s143
          %s145 = smul.addr %s144, 4
          %s146 = scalar_lea.hbm %s0, %s145
          %s148 = sshll.u32 %s146, 4
          %s149 = int_to_ptr.hbm [resolvable:$true] %s148
          %s150 = sshll.u32 %s139, 4
          %s151 = int_to_ptr.vmem [resolvable:$true] %s150
          %153 = dma.hbm_to_vmem [thread:$0]  %s149, 128, %s151, %s136
        $region20: #{tpu_custom_call.1} parent=15 // pred_fallthru
          _
        // Predicated region
        $region21: #{tpu_custom_call.1} parent=15 // pred_check
          %p154 = pneg %p79
        $region22: #{tpu_custom_call.1} parent=15 // pred_check_branch
          %156 = sbr.rel (%p154) target = $region24
        $region23: #{tpu_custom_call.1} parent=15 // pred_region
          %s157 = sand.u32 %s69, 1
          %s158 = scalar_lea.sflag [#allocation6], %s157
          %s159 = sand.u32 %s69, 1
          %s160 = smul.addr %s159, 8
          %s161 = scalar_lea.vmem [#allocation5], %s160
          %163 = vsyncadd %s158, 0
          %s164 = smul.addr %s25, 2
          %s165 = smul.addr %s24, 2
          %s166 = sadd.s32 %s164, %s165
          %s167 = smul.addr %s166, 4
          %s168 = scalar_lea.hbm %s1, %s167
          %s170 = sshll.u32 %s168, 4
          %s171 = int_to_ptr.hbm [resolvable:$true] %s170
          %s172 = sshll.u32 %s161, 4
          %s173 = int_to_ptr.vmem [resolvable:$true] %s172
          %175 = dma.hbm_to_vmem [thread:$0]  %s171, 128, %s173, %s158
        $region24: #{tpu_custom_call.1} parent=15 // pred_fallthru
          _
      $region16: #{tpu_custom_call.1} parent=5 // pred_fallthru
        _
      %p176 = scmp.le.s32.totalorder 1, %s17
      %p177 = scmp.lt.s32.totalorder %s17, 3
      %p178 = pnand %p176, %p177
      %p179 = pneg %p178
      // Predicated region
      $region25: #{tpu_custom_call.1} parent=5 // pred_check
        _
      $region26: #{tpu_custom_call.1} parent=5 // pred_check_branch
        %181 = sbr.rel (%p178) target = $region28
      $region27: #{tpu_custom_call.1} parent=5 // pred_region
        %s182 = ssub.s32 %s17, 1
        %s183 = sand.u32 %s44, 1
        %s184 = scalar_lea.sflag [#allocation3], %s183
        %s185 = sand.u32 %s44, 1
        %s186 = smul.addr %s185, 8
        %s187 = scalar_lea.vmem [#allocation2], %s186
        // Predicated region
        $region29: #{tpu_custom_call.1} parent=27 // pred_check
          %p188 = pneg %p57
        $region30: #{tpu_custom_call.1} parent=27 // pred_check_branch
          %190 = sbr.rel (%p188) target = $region32
        $region31: #{tpu_custom_call.1} parent=27 // pred_region
          %192 = dma.done %s184, 128
        $region32: #{tpu_custom_call.1} parent=27 // pred_fallthru
          _
        %s193 = sand.u32 %s72, 1
        %s194 = scalar_lea.sflag [#allocation6], %s193
        %s195 = sand.u32 %s72, 1
        %s196 = smul.addr %s195, 8
        %s197 = scalar_lea.vmem [#allocation5], %s196
        // Predicated region
        $region33: #{tpu_custom_call.1} parent=27 // pred_check
          %p198 = pneg %p85
        $region34: #{tpu_custom_call.1} parent=27 // pred_check_branch
          %200 = sbr.rel (%p198) target = $region36
        $region35: #{tpu_custom_call.1} parent=27 // pred_region
          %202 = dma.done %s194, 128
        $region36: #{tpu_custom_call.1} parent=27 // pred_fallthru
          _
        %s203 = sand.u32 %s44, 1
        %s204 = scalar_lea.sflag [#allocation3], %s203
        %s205 = sand.u32 %s44, 1
        %s206 = smul.addr %s205, 8
        %s207 = scalar_lea.vmem [#allocation2], %s206
        %p208 = pneg %p57
        %p209 = pneg %p54
        %s210 = sand.u32 %s72, 1
        %s211 = scalar_lea.sflag [#allocation6], %s210
        %s212 = sand.u32 %s72, 1
        %s213 = smul.addr %s212, 8
        %s214 = scalar_lea.vmem [#allocation5], %s213
        %p215 = pneg %p85
        %p216 = pneg %p82
        %p217 = pneg %p113
        %p218 = pneg %p110
        %s219 = sand.u32 %s100, 1
        %s220 = scalar_lea.sflag [#allocation4], %s219
        %s221 = sand.u32 %s100, 1
        %s222 = smul.addr %s221, 8
        %s223 = scalar_lea.vmem [#allocation7], %s222
        %v224 = vld [vmem:[%s187] sm:$0xff]
        %v225 = vld [vmem:[%s197] sm:$0xff]
        %v226 = vmul.f32 %v224, %v224
        %228 = vst [vmem:[#allocation1] ss:$2 sm:$0xff] %v224
        %v229 = vld.sshfl [vmem:[#allocation1] sm:$0xff pattern:$0x75316420]
        %v230 = vld.sshfl [vmem:[#allocation1 + $0x8] sm:$0xff pattern:$0x75316420]
        %vm233 = vcmask 1043456
        %v234 = vsel %vm233, %v229, 0.0
        %v235 = vsel %vm233, %v230, 0.0
        %v236 = vadd.f32 %v234, %v235
        %237 = vadd.xlane.f32.xlu0 %v236
        %v238 = vpop.xlane.xlu0 %237
        %240 = vst [vmem:[#allocation1] ss:$2 sm:$0xff] %v226
        %v241 = vld.sshfl [vmem:[#allocation1] sm:$0xff pattern:$0x75316420]
        %v242 = vld.sshfl [vmem:[#allocation1 + $0x8] sm:$0xff pattern:$0x75316420]
        %v245 = vsel %vm233, %v241, 0.0
        %v246 = vsel %vm233, %v242, 0.0
        %v247 = vadd.f32 %v245, %v246
        %248 = vadd.xlane.f32.xlu0 %v247
        %v249 = vpop.xlane.xlu0 %248
        %v250 = vmul.f32 %v225, %v225
        %252 = vst [vmem:[#allocation1] ss:$2 sm:$0xff] %v225
        %v253 = vld.sshfl [vmem:[#allocation1] sm:$0xff pattern:$0x75316420]
        %v254 = vld.sshfl [vmem:[#allocation1 + $0x8] sm:$0xff pattern:$0x75316420]
        %v257 = vsel %vm233, %v253, 0.0
        %v258 = vsel %vm233, %v254, 0.0
        %v259 = vadd.f32 %v257, %v258
        %260 = vadd.xlane.f32.xlu0 %v259
        %v261 = vpop.xlane.xlu0 %260
        %263 = vst [vmem:[#allocation1] ss:$2 sm:$0xff] %v250
        %v264 = vld.sshfl [vmem:[#allocation1] sm:$0xff pattern:$0x75316420]
        %v265 = vld.sshfl [vmem:[#allocation1 + $0x8] sm:$0xff pattern:$0x75316420]
        %v268 = vsel %vm233, %v264, 0.0
        %v269 = vsel %vm233, %v265, 0.0
        %v270 = vadd.f32 %v268, %v269
        %271 = vadd.xlane.f32.xlu0 %v270
        %v272 = vpop.xlane.xlu0 %271
        %v273 = vrcp.pop 256.0
        %v274 = vmul.f32 256.0, %v273
        %v275 = vsub.f32 1.0, %v274
        %v276 = vmul.f32 %v273, %v275
        %v277 = vadd.f32 %v273, %v276
        %vm278 = vweird.f32 %v273
        %v279 = vsel %vm278, %v273, %v277
        %v280 = vmul.f32 %v238, %v279
        %v281 = vmul.f32 %v261, %v279
        %v282 = vmul.f32 %v280, 256.0
        %v283 = vmul.f32 %v282, %v280
        %v284 = vsub.f32 %v249, %v283
        %v285 = vmax.f32 %v284, 0.0
        %v286 = vmul.f32 %v281, 256.0
        %v287 = vmul.f32 %v286, %v281
        %v288 = vsub.f32 %v272, %v287
        %v289 = vmax.f32 %v288, 0.0
        %v290 = vadd.f32 %v285, 2.3e-08
        %v291 = vmul.f32 %v290, %v279
        %v292 = vadd.f32 %v289, 2.3e-08
        %v293 = vmul.f32 %v292, %v279
        %v294 = vrsqrt.pop %v293
        %v295 = vmul.f32 %v294, %v293
        %v296 = vmul.f32 %v295, %v294
        %v297 = vmul.f32 0.5, %v296
        %v298 = vsub.f32 1.5, %v297
        %v299 = vmul.f32 %v294, %v298
        %v300 = vmul.f32 %v293, %v299
        %vm301 = vcmp.eq.f32.partialorder %v293, inf
        %v302 = vsel %vm301, %v293, %v300
        %vm303 = vcmp.eq.f32.partialorder %v293, 0.0
        %v304 = vand.u32 %v293, 2147483648
        %v305 = vsel %vm303, %v304, %v302
        %v306 = vrsqrt.pop %v291
        %v307 = vmul.f32 %v306, %v291
        %v308 = vmul.f32 %v307, %v306
        %v309 = vmul.f32 0.5, %v308
        %v310 = vsub.f32 1.5, %v309
        %v311 = vmul.f32 %v306, %v310
        %vm312 = vweird.f32 %v291
        %vm313 = vweird.f32 %v306
        %vm314 = vmor %vm312, %vm313
        %v315 = vsel %vm314, %v306, %v311
        %v316 = vmul.f32 %v305, %v315
        %v317 = vmul.f32 %v280, %v316
        %v318 = vsub.f32 %v281, %v317
        %v321 = vunpack.c.l.s4 839922192
        %v322 = vunpack.c.0.s8 %v321
        %v323 = vperm.slane %v316, %v322
        %v325 = vmul.f32 %v224, %v323
        %v328 = vunpack.c.l.s4 839922192
        %v329 = vunpack.c.0.s8 %v328
        %v330 = vperm.slane %v318, %v329
        %v332 = vadd.f32 %v325, %v330
        %333 = vst [vmem:[%s223] sm:$0xff] %v332
        %s334 = sand.u32 %s100, 1
        %s335 = scalar_lea.sflag [#allocation4], %s334
        %s336 = sand.u32 %s100, 1
        %s337 = smul.addr %s336, 8
        %s338 = scalar_lea.vmem [#allocation7], %s337
        // Predicated region
        $region37: #{tpu_custom_call.1} parent=27 // pred_check
          %p339 = pneg %p110
        $region38: #{tpu_custom_call.1} parent=27 // pred_check_branch
          %341 = sbr.rel (%p339) target = $region40
        $region39: #{tpu_custom_call.1} parent=27 // pred_region
          %343 = vsyncadd %s335, 0
          %s344 = smul.addr %s27, 2
          %s345 = smul.addr %s26, 2
          %s346 = sadd.s32 %s344, %s345
          %s347 = smul.addr %s346, 4
          %s348 = scalar_lea.hbm %s2, %s347
          %s350 = sshll.u32 %s338, 4
          %s351 = int_to_ptr.vmem [resolvable:$true] %s350
          %s352 = sshll.u32 %s348, 4
          %s353 = int_to_ptr.hbm [resolvable:$true] %s352
          %355 = dma.vmem_to_hbm [thread:$0]  %s351, 128, %s353, %s335
        $region40: #{tpu_custom_call.1} parent=27 // pred_fallthru
          _
      $region28: #{tpu_custom_call.1} parent=5 // pred_fallthru
        _
      %p356 = scmp.le.s32.totalorder 2, %s17
      // Predicated region
      $region41: #{tpu_custom_call.1} parent=5 // pred_check
        %p357 = pneg %p356
      $region42: #{tpu_custom_call.1} parent=5 // pred_check_branch
        %359 = sbr.rel (%p357) target = $region44
      $region43: #{tpu_custom_call.1} parent=5 // pred_region
        %s360 = ssub.s32 %s17, 2
        // Predicated region
        $region45: #{tpu_custom_call.1} parent=43 // pred_check
          %p361 = pneg %p116
        $region46: #{tpu_custom_call.1} parent=43 // pred_check_branch
          %363 = sbr.rel (%p361) target = $region48
        $region47: #{tpu_custom_call.1} parent=43 // pred_region
          %s364 = sand.u32 %s101, 1
          %s365 = scalar_lea.sflag [#allocation4], %s364
          %s366 = sand.u32 %s101, 1
          %s367 = smul.addr %s366, 8
          %s368 = scalar_lea.vmem [#allocation7], %s367
          %370 = dma.done %s365, 128
        $region48: #{tpu_custom_call.1} parent=43 // pred_fallthru
          _
      $region44: #{tpu_custom_call.1} parent=5 // pred_fallthru
        _
    $region6: #{tpu_custom_call.1} parent=1 // loop_footer
      %s21 = sadd.s32 1, %s17
    $region7: #{tpu_custom_call.1} parent=1 // loop_footer_branch
      %16 = sbr.rel target = $region3
    $region8: #{tpu_custom_call.1} parent=1 // loop_exit
      _
    %371 = vsyncpa [#allocation3], 1
    %s372 = scalar_lea.sflag [#allocation3], 1
    %373 = vsyncpa %s372, 1
    %374 = vsyncpa [#allocation6], 1
    %s375 = scalar_lea.sflag [#allocation6], 1
    %376 = vsyncpa %s375, 1
    %377 = vsyncpa [#allocation4], 1
    %s378 = scalar_lea.sflag [#allocation4], 1
    %379 = vsyncpa %s378, 1

</llo_original>
